<compile_context>
chip_gen: v7x
topology: tpu7x:2x2x1
jax: 0.10.0
libtpu: 0.0.40
codegen_flags: <defaults>
</compile_context>

<pallas_src>
import functools

import jax
import jax.numpy as jnp
from jax.experimental import pallas as pl
from jax.experimental.pallas import tpu as pltpu

LANE = 128
MAX_BLOCK_ROWS_XT = 2048   # 2048 x 128 f32 = 1 MiB per block per pipeline buffer
MAX_BLOCK_ROWS_P = 512     # keep the param double-buffer small during the BCE phase
X_SENTINEL = -1000.0       # BCE(x=-1000, t=0) == 0 exactly in f32/bf16


def _cdiv(a, b):
    return -(-a // b)


def _round_up(a, b):
    return _cdiv(a, b) * b


def _pad_to_blocks(flat, pad_value, max_rows):
    """[N] -> ([R, 128] lane-dense slab, block_rows, num_blocks).

    R is a multiple of block_rows (itself a multiple of 8), so every grid step sees a
    full block and no in-kernel masking is needed; padded elements use `pad_value`
    so their contribution to the reduction is exactly zero.
    """
    n = flat.shape[0]
    rows = _round_up(_cdiv(n, LANE), 8)
    block_rows = min(max_rows, rows)
    rows_padded = _round_up(rows, block_rows)
    total = rows_padded * LANE
    if total != n:  # trace-time check; no copy when already block-aligned
        pad = jnp.full((total - n,), pad_value, flat.dtype)
        flat = jnp.concatenate([flat, pad])
    return flat.reshape(rows_padded, LANE), block_rows, rows_padded // block_rows


# ---------------------------------------------------------------------------
# Fused kernel: BCE-with-logits mean + l2_weight * sum(p^2)
# ---------------------------------------------------------------------------
def _combined_loss_kernel(x_ref, t_ref, p_ref, o_ref, bce_acc, l2_acc, *,
                          gx, g_total, inv_n, l2_w):
    v = pl.program_id(0)  # virtual tile index over [BCE tiles | param tiles]

    @pl.when(v == 0)
    def _init():
        bce_acc[...] = jnp.zeros_like(bce_acc)
        l2_acc[...] = jnp.zeros_like(l2_acc)

    @pl.when(v < gx)
    def _bce_phase():
        x = x_ref[...].astype(jnp.float32)
        t = t_ref[...].astype(jnp.float32)
        # numerically stable BCE-with-logits: max(x,0) - x*t + log1p(exp(-|x|))
        # Sentinel-padded tail (x=-1000, t=0) contributes exactly 0.
        loss = jnp.maximum(x, 0.0) - x * t + jnp.log1p(jnp.exp(-jnp.abs(x)))
        bce_acc[...] += jnp.sum(loss, axis=0, keepdims=True)

    @pl.when(v >= gx)
    def _l2_phase():
        p = p_ref[...].astype(jnp.float32)
        l2_acc[...] += jnp.sum(p * p, axis=0, keepdims=True)

    @pl.when(v == g_total - 1)
    def _finalize():
        o_ref[0, 0] = (jnp.sum(bce_acc[...]) * inv_n
                       + jnp.sum(l2_acc[...]) * l2_w)


# ---------------------------------------------------------------------------
# Wrapper
# ---------------------------------------------------------------------------
def combined_loss(outputs, targets, params, l2_weight=0.001):
    """Pallas implementation of CombinedLoss.forward.

    outputs, targets: same shape (any layout), streamed in native dtype.
    params: list of parameter arrays (the "model.parameters()").
    """
    n_x = int(outputs.size)
    x2, brx, gx = _pad_to_blocks(jnp.ravel(outputs), X_SENTINEL, MAX_BLOCK_ROWS_XT)
    t2, _, _ = _pad_to_blocks(jnp.ravel(targets), 0.0, MAX_BLOCK_ROWS_XT)

    # Params streamed in native dtype (cast to f32 inside the kernel).
    # TODO(synk): for very large models, stream each parameter directly instead of the
    # concatenate (the concat is an extra full HBM read+write of every parameter).
    if params:
        same_dtype = all(p.dtype == params[0].dtype for p in params)
        flats = [jnp.ravel(p) if same_dtype else jnp.ravel(p).astype(jnp.float32)
                 for p in params]
        p_flat = flats[0] if len(flats) == 1 else jnp.concatenate(flats)
    else:
        p_flat = jnp.zeros((LANE,), jnp.float32)
    n_p = int(p_flat.shape[0])
    p2, brp, gp = _pad_to_blocks(p_flat, 0.0, MAX_BLOCK_ROWS_P)

    g_total = gx + gp

    # Clamped index maps: once a phase is done, that operand's block index stops
    # changing, so no redundant DMA traffic is issued for the inactive operand.
    xt_map = lambda v: (jnp.minimum(v, gx - 1), 0)
    p_map = lambda v: (jnp.minimum(jnp.maximum(v - gx, 0), gp - 1), 0)

    kernel = functools.partial(
        _combined_loss_kernel,
        gx=gx, g_total=g_total, inv_n=1.0 / n_x, l2_w=float(l2_weight))

    bytes_accessed = int(x2.size * x2.dtype.itemsize
                         + t2.size * t2.dtype.itemsize
                         + p2.size * p2.dtype.itemsize + 4)

    # TODO(synk): on v7x, shard the tile range across the 2 TensorCores with a leading
    # CORE_PARALLEL axis (or pl.core_map) once the split is verified on hardware.
    out = pl.pallas_call(
        kernel,
        out_shape=jax.ShapeDtypeStruct((1, 1), jnp.float32),
        grid_spec=pltpu.PrefetchScalarGridSpec(
            num_scalar_prefetch=0,
            grid=(g_total,),
            in_specs=[
                pl.BlockSpec((brx, LANE), xt_map),
                pl.BlockSpec((brx, LANE), xt_map),
                pl.BlockSpec((brp, LANE), p_map),
            ],
            out_specs=pl.BlockSpec((1, 1), lambda v: (0, 0),
                                   memory_space=pltpu.MemorySpace.SMEM),
            scratch_shapes=[pltpu.VMEM((1, LANE), jnp.float32),   # BCE raw sum
                            pltpu.VMEM((1, LANE), jnp.float32)],  # L2 raw sum
        ),
        compiler_params=pltpu.CompilerParams(
            dimension_semantics=("arbitrary",),
            vmem_limit_bytes=32 * 1024 * 1024),
        cost_estimate=pl.CostEstimate(
            flops=8 * n_x + 2 * n_p,
            transcendentals=2 * n_x,
            bytes_accessed=bytes_accessed),
    )(x2, t2, p2)

    return out[0, 0]


# ---------------------------------------------------------------------------
# Pure-JAX reference (for silent verification)
# ---------------------------------------------------------------------------
def combined_loss_ref(outputs, targets, params, l2_weight=0.001):
    x = outputs.astype(jnp.float32)
    t = targets.astype(jnp.float32)
    loss = jnp.maximum(x, 0.0) - x * t + jnp.log1p(jnp.exp(-jnp.abs(x)))
    bce = jnp.mean(loss)
    l2 = sum(jnp.sum(p.astype(jnp.float32) ** 2) for p in params)
    return bce + l2_weight * l2


if __name__ == "__main__":
    key = jax.random.PRNGKey(0)
    k1, k2, k3, k4, k5, k6 = jax.random.split(key, 6)

    # Small NCHW logits/labels.
    outputs = jax.random.normal(k1, (2, 4, 16, 16), dtype=jnp.float32)
    targets = (jax.random.uniform(k2, (2, 4, 16, 16)) > 0.5).astype(jnp.float32)

    # Deterministic synthetic "model" parameters (tiny conv + linear net).
    params = [
        0.1 * jax.random.normal(k3, (4, 4, 3, 3), dtype=jnp.float32),  # conv weight
        0.1 * jax.random.normal(k4, (4,), dtype=jnp.float32),          # conv bias
        0.1 * jax.random.normal(k5, (16, 32), dtype=jnp.float32),      # linear weight
        0.1 * jax.random.normal(k6, (16,), dtype=jnp.float32),         # linear bias
    ]

    total = combined_loss(outputs, targets, params, l2_weight=0.001)
    total = jax.block_until_ready(total)

    ref = combined_loss_ref(outputs, targets, params, l2_weight=0.001)
    assert jnp.allclose(total, ref, rtol=1e-5, atol=1e-5), (total, ref)

    print("KERNEL_OK")
</pallas_src>

<mosaic_0001>
module attributes {stable_mosaic.version = 11 : i64} {
  func.func @_combined_loss_kernel(%arg0: i32, %arg1: memref<16x128xf32, #tpu.memory_space<vmem>>, %arg2: memref<16x128xf32, #tpu.memory_space<vmem>>, %arg3: memref<8x128xf32, #tpu.memory_space<vmem>>, %arg4: memref<1x1xf32, #tpu.memory_space<smem>>, %arg5: memref<1x128xf32, #tpu.memory_space<vmem>>, %arg6: memref<1x128xf32, #tpu.memory_space<vmem>>) attributes {dimension_semantics = [#tpu.dimension_semantics<arbitrary>], iteration_bounds = array<i64: 2>, scalar_prefetch = 0 : i64, scratch_operands = 2 : i64, tpu.core_type = #tpu.core_type<tc>, window_params = [{transform_indices = @transform_0, window_bounds = array<i64: 16, 128>}, {transform_indices = @transform_1, window_bounds = array<i64: 16, 128>}, {transform_indices = @transform_2, window_bounds = array<i64: 8, 128>}, {transform_indices = @transform_3, window_bounds = array<i64: 1, 1>}]} {
    %c0_i32 = arith.constant 0 : i32
    %0 = arith.cmpi eq, %arg0, %c0_i32 : i32
    %1 = arith.extui %0 : i1 to i32
    %c0_i32_0 = arith.constant 0 : i32
    %2 = arith.cmpi ne, %1, %c0_i32_0 : i32
    scf.if %2 {
      %cst = arith.constant 0.000000e+00 : f32
      %12 = vector.broadcast %cst : f32 to vector<1x128xf32>
      %c0 = arith.constant 0 : index
      %c0_6 = arith.constant 0 : index
      %13 = vector.load %arg5[%c0, %c0_6] : memref<1x128xf32, #tpu.memory_space<vmem>>, vector<1x128xf32>
      tpu.vector_store %arg5[%c0, %c0_6], %12 {strides = array<i32>} : memref<1x128xf32, #tpu.memory_space<vmem>>, vector<1x128xf32>,
      %cst_7 = arith.constant 0.000000e+00 : f32
      %14 = vector.broadcast %cst_7 : f32 to vector<1x128xf32>
      %c0_8 = arith.constant 0 : index
      %c0_9 = arith.constant 0 : index
      %15 = vector.load %arg6[%c0_8, %c0_9] : memref<1x128xf32, #tpu.memory_space<vmem>>, vector<1x128xf32>
      tpu.vector_store %arg6[%c0_8, %c0_9], %14 {strides = array<i32>} : memref<1x128xf32, #tpu.memory_space<vmem>>, vector<1x128xf32>,
    } else {
    }
    %c1_i32 = arith.constant 1 : i32
    %3 = arith.cmpi slt, %arg0, %c1_i32 : i32
    %4 = arith.extui %3 : i1 to i32
    %c0_i32_1 = arith.constant 0 : i32
    %5 = arith.cmpi ne, %4, %c0_i32_1 : i32
    scf.if %5 {
      %c0 = arith.constant 0 : index
      %c0_6 = arith.constant 0 : index
      %12 = vector.load %arg1[%c0, %c0_6] : memref<16x128xf32, #tpu.memory_space<vmem>>, vector<16x128xf32>
      %c0_7 = arith.constant 0 : index
      %c0_8 = arith.constant 0 : index
      %13 = vector.load %arg2[%c0_7, %c0_8] : memref<16x128xf32, #tpu.memory_space<vmem>>, vector<16x128xf32>
      %cst = arith.constant 0.000000e+00 : f32
      %14 = vector.broadcast %cst : f32 to vector<16x128xf32>
      %15 = arith.maximumf %12, %14 : vector<16x128xf32>
      %16 = arith.mulf %12, %13 : vector<16x128xf32>
      %17 = arith.subf %15, %16 : vector<16x128xf32>
      %18 = math.absf %12 : vector<16x128xf32>
      %cst_9 = arith.constant 0.000000e+00 : f32
      %19 = vector.broadcast %cst_9 : f32 to vector<16x128xf32>
      %20 = arith.subf %19, %18 : vector<16x128xf32>
      %21 = math.exp %20 : vector<16x128xf32>
      %22 = math.log1p %21 : vector<16x128xf32>
      %23 = arith.addf %17, %22 : vector<16x128xf32>
      %c0_10 = arith.constant 0 : index
      %c0_11 = arith.constant 0 : index
      %24 = vector.load %arg5[%c0_10, %c0_11] : memref<1x128xf32, #tpu.memory_space<vmem>>, vector<1x128xf32>
      %cst_12 = arith.constant dense<0.000000e+00> : vector<128xf32>
      %25 = vector.multi_reduction <add>, %23, %cst_12 [0] : vector<16x128xf32> to vector<128xf32>
      %26 = vector.shape_cast %25 : vector<128xf32> to vector<1x128xf32>
      %27 = arith.addf %24, %26 : vector<1x128xf32>
      %c0_13 = arith.constant 0 : index
      %c0_14 = arith.constant 0 : index
      %28 = vector.load %arg5[%c0_13, %c0_14] : memref<1x128xf32, #tpu.memory_space<vmem>>, vector<1x128xf32>
      tpu.vector_store %arg5[%c0_13, %c0_14], %27 {strides = array<i32>} : memref<1x128xf32, #tpu.memory_space<vmem>>, vector<1x128xf32>,
    } else {
    }
    %c1_i32_2 = arith.constant 1 : i32
    %6 = arith.cmpi sge, %arg0, %c1_i32_2 : i32
    %7 = arith.extui %6 : i1 to i32
    %c0_i32_3 = arith.constant 0 : i32
    %8 = arith.cmpi ne, %7, %c0_i32_3 : i32
    scf.if %8 {
      %c0 = arith.constant 0 : index
      %c0_6 = arith.constant 0 : index
      %12 = vector.load %arg3[%c0, %c0_6] : memref<8x128xf32, #tpu.memory_space<vmem>>, vector<8x128xf32>
      %c0_7 = arith.constant 0 : index
      %c0_8 = arith.constant 0 : index
      %13 = vector.load %arg6[%c0_7, %c0_8] : memref<1x128xf32, #tpu.memory_space<vmem>>, vector<1x128xf32>
      %14 = arith.mulf %12, %12 : vector<8x128xf32>
      %cst = arith.constant dense<0.000000e+00> : vector<128xf32>
      %15 = vector.multi_reduction <add>, %14, %cst [0] : vector<8x128xf32> to vector<128xf32>
      %16 = vector.shape_cast %15 : vector<128xf32> to vector<1x128xf32>
      %17 = arith.addf %13, %16 : vector<1x128xf32>
      %c0_9 = arith.constant 0 : index
      %c0_10 = arith.constant 0 : index
      %18 = vector.load %arg6[%c0_9, %c0_10] : memref<1x128xf32, #tpu.memory_space<vmem>>, vector<1x128xf32>
      tpu.vector_store %arg6[%c0_9, %c0_10], %17 {strides = array<i32>} : memref<1x128xf32, #tpu.memory_space<vmem>>, vector<1x128xf32>,
    } else {
    }
    %c1_i32_4 = arith.constant 1 : i32
    %9 = arith.cmpi eq, %arg0, %c1_i32_4 : i32
    %10 = arith.extui %9 : i1 to i32
    %c0_i32_5 = arith.constant 0 : i32
    %11 = arith.cmpi ne, %10, %c0_i32_5 : i32
    scf.if %11 {
      %c0 = arith.constant 0 : index
      %c0_6 = arith.constant 0 : index
      %12 = vector.load %arg5[%c0, %c0_6] : memref<1x128xf32, #tpu.memory_space<vmem>>, vector<1x128xf32>
      %13 = vector.shape_cast %12 : vector<1x128xf32> to vector<1x1x128xf32>
      %cst = arith.constant dense<0.000000e+00> : vector<1xf32>
      %14 = vector.multi_reduction <add>, %13, %cst [1, 2] : vector<1x1x128xf32> to vector<1xf32>
      %15 = vector.shape_cast %14 : vector<1xf32> to vector<1x1x1xf32>
      %16 = vector.extract %15[0, 0, 0] : f32 from vector<1x1x1xf32>
      %cst_7 = arith.constant 4.8828125E-4 : f32
      %17 = arith.mulf %16, %cst_7 : f32
      %c0_8 = arith.constant 0 : index
      %c0_9 = arith.constant 0 : index
      %18 = vector.load %arg6[%c0_8, %c0_9] : memref<1x128xf32, #tpu.memory_space<vmem>>, vector<1x128xf32>
      %19 = vector.shape_cast %18 : vector<1x128xf32> to vector<1x1x128xf32>
      %cst_10 = arith.constant dense<0.000000e+00> : vector<1xf32>
      %20 = vector.multi_reduction <add>, %19, %cst_10 [1, 2] : vector<1x1x128xf32> to vector<1xf32>
      %21 = vector.shape_cast %20 : vector<1xf32> to vector<1x1x1xf32>
      %22 = vector.extract %21[0, 0, 0] : f32 from vector<1x1x1xf32>
      %cst_11 = arith.constant 1.000000e-03 : f32
      %23 = arith.mulf %22, %cst_11 : f32
      %24 = arith.addf %17, %23 : f32
      %c0_12 = arith.constant 0 : index
      %c0_13 = arith.constant 0 : index
      %25 = memref.load %arg4[%c0_12, %c0_13] : memref<1x1xf32, #tpu.memory_space<smem>>
      memref.store %24, %arg4[%c0_12, %c0_13] : memref<1x1xf32, #tpu.memory_space<smem>>
    } else {
    }
    return
  }
  func.func @transform_0(%arg0: i32) -> (i32, i32) {
    %c0_i32 = arith.constant 0 : i32
    %0 = arith.minsi %arg0, %c0_i32 : i32
    %c0_i32_0 = arith.constant 0 : i32
    %c0_i32_1 = arith.constant 0 : i32
    return %0, %c0_i32_0 : i32, i32
  }
  func.func @transform_1(%arg0: i32) -> (i32, i32) {
    %c0_i32 = arith.constant 0 : i32
    %0 = arith.minsi %arg0, %c0_i32 : i32
    %c0_i32_0 = arith.constant 0 : i32
    %c0_i32_1 = arith.constant 0 : i32
    return %0, %c0_i32_0 : i32, i32
  }
  func.func @transform_2(%arg0: i32) -> (i32, i32) {
    %c1_i32 = arith.constant 1 : i32
    %0 = arith.subi %arg0, %c1_i32 : i32
    %c0_i32 = arith.constant 0 : i32
    %1 = arith.maxsi %0, %c0_i32 : i32
    %c0_i32_0 = arith.constant 0 : i32
    %2 = arith.minsi %1, %c0_i32_0 : i32
    %c0_i32_1 = arith.constant 0 : i32
    %c0_i32_2 = arith.constant 0 : i32
    return %2, %c0_i32_1 : i32, i32
  }
  func.func @transform_3(%arg0: i32) -> (i32, i32) {
    %c0_i32 = arith.constant 0 : i32
    %c0_i32_0 = arith.constant 0 : i32
    %c0_i32_1 = arith.constant 0 : i32
    return %c0_i32, %c0_i32_0 : i32, i32
  }
}

</mosaic_0001>

<llo_original>
// kernel: tpu_custom_call.1
$region0: #{tpu_custom_call.1}
  #allocation0 [shape = 'u32[]', space=smem, size = 0x4, offset = 0x4, fixed_abs, tag = 'smem constant byte address 0x4 - core index']
  #allocation1 [shape = 'u32[144,128]{1,0:T(1,128)}', space=vmem, size = 0x12000, scoped, tag = 'internal scratch']
  #allocation2 [shape = 'f32[1,128]{1,0:T(1,128)}', space=vmem, size = 0x200, scoped, tag = 'scratch operand']
  #allocation3 [shape = 'f32[1,128]{1,0:T(1,128)}', space=vmem, size = 0x200, scoped, tag = 'scratch operand']
  %s0 = inlined_call_operand.hbm [shape: f32[16,128], index: 0, kind: input, shape index: {}]
  %s1 = inlined_call_operand.hbm [shape: f32[16,128], index: 1, kind: input, shape index: {}]
  %s2 = inlined_call_operand.hbm [shape: f32[8,128], index: 2, kind: input, shape index: {}]
  %s3 = inlined_call_operand.hbm [shape: f32[1,1], index: 3, kind: output, shape index: {}]
  %s4 = sld [smem:[#allocation0]]
  $region73: #{tpu_custom_call.1} parent=0
    _
  %s6 = ssub.s32 1, %s4
  %s7 = scalar_select 0, %s6, %s4
  $region1: #{tpu_custom_call.1} parent=0
    #allocation4 [shape = 'u8[16384]{0}', space=vmem, size = 0x4000, scoped, tag = 'input window, operand 0']
    #allocation5 [shape = 's32[2]{0}', space=sflag, size = 0x8, scoped, tag = 'scoped memory for tpu_custom_call.1']
    #allocation6 [shape = 's32[2]{0}', space=sflag, size = 0x8, scoped, tag = 'scoped memory for tpu_custom_call.1']
    #allocation7 [shape = 'u8[16384]{0}', space=vmem, size = 0x4000, scoped, tag = 'input window, operand 1']
    #allocation8 [shape = 's32[2]{0}', space=sflag, size = 0x8, scoped, tag = 'scoped memory for tpu_custom_call.1']
    #allocation9 [shape = 'u8[8192]{0}', space=vmem, size = 0x2000, scoped, tag = 'input window, operand 2']
    #allocation10 [shape = 'u8[512]{0}', space=smem, size = 0x200, scoped, tag = 'output window, operand 0, single buffered']
    %8 = vsyncpa [#allocation5], 0
    %s9 = scalar_lea.sflag [#allocation5], 1
    %10 = vsyncpa %s9, 0
    %11 = vsyncpa [#allocation8], 0
    %s12 = scalar_lea.sflag [#allocation8], 1
    %13 = vsyncpa %s12, 0
    %14 = vsyncpa [#allocation6], 0
    loop: start=0, step=1, limit=4
    $region2: #{tpu_custom_call.1} parent=1 // loop_pre_header
      _
    $region3: #{tpu_custom_call.1} parent=1 // loop_header
      %s16 = sphi 0, %s20
      %p17 = scmp.ge.s32.totalorder %s16, 4
      %s30 = sphi 0, %s32
      %s33 = sphi 0, %s30
      %s34 = sphi 0, %s33
      %s50 = sphi 0, %s34
      %s60 = sphi 0, %s62
      %s63 = sphi 0, %s60
      %s64 = sphi 0, %s63
      %s80 = sphi 0, %s64
      %s96 = sphi 0, %s98
      %s99 = sphi 0, %s96
      %s100 = sphi 0, %s99
      %s116 = sphi 0, %s100
      %s120 = sphi 0, %s120
      %s122 = sphi 0, %s120
      %s123 = sphi 0, %s122
      %s137 = sphi 0, %s123
    $region4: #{tpu_custom_call.1} parent=1 // loop_header_branch
      %19 = sbr.rel (%p17) target = $region8
    $region5: #{tpu_custom_call.1} parent=1 // loop_body
      %s21 = ssub.s32 %s16, 1
      %s22 = ssub.s32 %s16, 2
      %s23 = sadd.s32 %s16, 1
      %p24 = scmp.lt.s32.totalorder %s16, 0
      %s25 = scalar_select %p24, %s16, 0
      %p26 = scmp.lt.s32.totalorder %s23, 0
      %s27 = scalar_select %p26, %s23, 0
      %s28 = ssub.s32 %s25, %s27
      %p29 = scmp.eq.s32.totalorder %s28, 0
      %s31 = sadd.s32 %s30, 1
      %s32 = scalar_select %p29, %s30, %s31
      %p35 = pneg %p29
      %p36 = scmp.eq.s32.totalorder %s16, 1
      %p37 = por %p35, %p36
      %p38 = scmp.ne.s32.totalorder %s30, %s33
      %p39 = scmp.eq.s32.totalorder %s16, 0
      %p40 = por %p38, %p39
      %p41 = scmp.ne.s32.totalorder %s30, %s33
      %p42 = scmp.eq.s32.totalorder %s21, 1
      %p43 = por %p41, %p42
      %p44 = scmp.ne.s32.totalorder %s33, %s34
      %p45 = scmp.eq.s32.totalorder %s21, 0
      %p46 = por %p44, %p45
      %p47 = scmp.ne.s32.totalorder %s33, %s34
      %p48 = scmp.eq.s32.totalorder %s22, 1
      %p49 = por %p47, %p48
      %p51 = scmp.ne.s32.totalorder %s34, %s50
      %p52 = scmp.eq.s32.totalorder %s22, 0
      %p53 = por %p51, %p52
      %p54 = scmp.lt.s32.totalorder %s16, 0
      %s55 = scalar_select %p54, %s16, 0
      %p56 = scmp.lt.s32.totalorder %s23, 0
      %s57 = scalar_select %p56, %s23, 0
      %s58 = ssub.s32 %s55, %s57
      %p59 = scmp.eq.s32.totalorder %s58, 0
      %s61 = sadd.s32 %s60, 1
      %s62 = scalar_select %p59, %s60, %s61
      %p65 = pneg %p59
      %p66 = scmp.eq.s32.totalorder %s16, 1
      %p67 = por %p65, %p66
      %p68 = scmp.ne.s32.totalorder %s60, %s63
      %p69 = scmp.eq.s32.totalorder %s16, 0
      %p70 = por %p68, %p69
      %p71 = scmp.ne.s32.totalorder %s60, %s63
      %p72 = scmp.eq.s32.totalorder %s21, 1
      %p73 = por %p71, %p72
      %p74 = scmp.ne.s32.totalorder %s63, %s64
      %p75 = scmp.eq.s32.totalorder %s21, 0
      %p76 = por %p74, %p75
      %p77 = scmp.ne.s32.totalorder %s63, %s64
      %p78 = scmp.eq.s32.totalorder %s22, 1
      %p79 = por %p77, %p78
      %p81 = scmp.ne.s32.totalorder %s64, %s80
      %p82 = scmp.eq.s32.totalorder %s22, 0
      %p83 = por %p81, %p82
      %s84 = ssub.s32 %s16, 1
      %p85 = scmp.gt.s32.totalorder %s84, 0
      %s86 = scalar_select %p85, %s84, 0
      %p87 = scmp.lt.s32.totalorder %s86, 0
      %s88 = scalar_select %p87, %s86, 0
      %s89 = ssub.s32 %s23, 1
      %p90 = scmp.gt.s32.totalorder %s89, 0
      %s91 = scalar_select %p90, %s89, 0
      %p92 = scmp.lt.s32.totalorder %s91, 0
      %s93 = scalar_select %p92, %s91, 0
      %s94 = ssub.s32 %s88, %s93
      %p95 = scmp.eq.s32.totalorder %s94, 0
      %s97 = sadd.s32 %s96, 1
      %s98 = scalar_select %p95, %s96, %s97
      %p101 = pneg %p95
      %p102 = scmp.eq.s32.totalorder %s16, 1
      %p103 = por %p101, %p102
      %p104 = scmp.ne.s32.totalorder %s96, %s99
      %p105 = scmp.eq.s32.totalorder %s16, 0
      %p106 = por %p104, %p105
      %p107 = scmp.ne.s32.totalorder %s96, %s99
      %p108 = scmp.eq.s32.totalorder %s21, 1
      %p109 = por %p107, %p108
      %p110 = scmp.ne.s32.totalorder %s99, %s100
      %p111 = scmp.eq.s32.totalorder %s21, 0
      %p112 = por %p110, %p111
      %p113 = scmp.ne.s32.totalorder %s99, %s100
      %p114 = scmp.eq.s32.totalorder %s22, 1
      %p115 = por %p113, %p114
      %p117 = scmp.ne.s32.totalorder %s100, %s116
      %p118 = scmp.eq.s32.totalorder %s22, 0
      %p119 = por %p117, %p118
      %s121 = sadd.s32 %s120, 1
      %p124 = scmp.eq.s32.totalorder %s16, 1
      %p125 = scmp.ne.s32.totalorder %s120, %s122
      %p126 = scmp.eq.s32.totalorder %s16, 0
      %p127 = por %p125, %p126
      %p128 = scmp.ne.s32.totalorder %s120, %s122
      %p129 = scmp.eq.s32.totalorder %s21, 1
      %p130 = por %p128, %p129
      %p131 = scmp.ne.s32.totalorder %s122, %s123
      %p132 = scmp.eq.s32.totalorder %s21, 0
      %p133 = por %p131, %p132
      %p134 = scmp.ne.s32.totalorder %s122, %s123
      %p135 = scmp.eq.s32.totalorder %s22, 1
      %p136 = por %p134, %p135
      %p138 = scmp.ne.s32.totalorder %s123, %s137
      %p139 = scmp.eq.s32.totalorder %s22, 0
      %p140 = por %p138, %p139
      %p141 = scmp.le.s32.totalorder 1, %s16
      %p142 = scmp.lt.s32.totalorder %s16, 3
      %p143 = pnand %p141, %p142
      %p144 = pneg %p143
      // Predicated region
      $region9: #{tpu_custom_call.1} parent=5 // pred_check
        _
      $region10: #{tpu_custom_call.1} parent=5 // pred_check_branch
        %146 = sbr.rel (%p143) target = $region12
      $region11: #{tpu_custom_call.1} parent=5 // pred_region
        %s147 = ssub.s32 %s16, 1
      $region12: #{tpu_custom_call.1} parent=5 // pred_fallthru
        _
      %p148 = scmp.lt.s32.totalorder %s16, 2
      // Predicated region
      $region13: #{tpu_custom_call.1} parent=5 // pred_check
        %p149 = pneg %p148
      $region14: #{tpu_custom_call.1} parent=5 // pred_check_branch
        %151 = sbr.rel (%p149) target = $region16
      $region15: #{tpu_custom_call.1} parent=5 // pred_region
        // Predicated region
        $region17: #{tpu_custom_call.1} parent=15 // pred_check
          %p152 = pneg %p40
        $region18: #{tpu_custom_call.1} parent=15 // pred_check_branch
          %154 = sbr.rel (%p152) target = $region20
        $region19: #{tpu_custom_call.1} parent=15 // pred_region
          %s155 = sand.u32 %s30, 1
          %s156 = scalar_lea.sflag [#allocation5], %s155
          %s157 = sand.u32 %s30, 1
          %s158 = smul.addr %s157, 16
          %s159 = scalar_lea.vmem [#allocation4], %s158
          %p160 = scmp.lt.s32.totalorder %s16, 0
          %s161 = scalar_select %p160, %s16, 0
          %s162 = smul.u32 2, %s161
          %s164 = ssub.s32 256, 256
          %165 = vsyncadd %s156, %s164
          %s166 = smul.addr %s162, 128
          %s167 = scalar_lea.hbm %s0, %s166
          %s168 = sshll.u32 %s159, 4
          %s169 = int_to_ptr.vmem [resolvable:$true] %s168
          %174 = dma.hbm_to_vmem [thread:$0]  %s167, 256, %s169, %s156, 128, 128, 8
        $region20: #{tpu_custom_call.1} parent=15 // pred_fallthru
          _
        // Predicated region
        $region21: #{tpu_custom_call.1} parent=15 // pred_check
          %p175 = pneg %p70
        $region22: #{tpu_custom_call.1} parent=15 // pred_check_branch
          %177 = sbr.rel (%p175) target = $region24
        $region23: #{tpu_custom_call.1} parent=15 // pred_region
          %s178 = sand.u32 %s16, 1
          %s179 = scalar_lea.sflag [#allocation8], %s178
          %s180 = sand.u32 %s60, 1
          %s181 = smul.addr %s180, 16
          %s182 = scalar_lea.vmem [#allocation7], %s181
          %p183 = scmp.lt.s32.totalorder %s16, 0
          %s184 = scalar_select %p183, %s16, 0
          %s185 = smul.u32 2, %s184
          %s187 = ssub.s32 256, 256
          %188 = vsyncadd %s179, %s187
          %s189 = smul.addr %s185, 128
          %s190 = scalar_lea.hbm %s1, %s189
          %s191 = sshll.u32 %s182, 4
          %s192 = int_to_ptr.vmem [resolvable:$true] %s191
          %197 = dma.hbm_to_vmem [thread:$0]  %s190, 256, %s192, %s179, 128, 128, 8
        $region24: #{tpu_custom_call.1} parent=15 // pred_fallthru
          _
        // Predicated region
        $region25: #{tpu_custom_call.1} parent=15 // pred_check
          %p198 = pneg %p106
        $region26: #{tpu_custom_call.1} parent=15 // pred_check_branch
          %200 = sbr.rel (%p198) target = $region28
        $region27: #{tpu_custom_call.1} parent=15 // pred_region
          %s201 = sand.u32 %s16, 1
          %s202 = scalar_lea.sflag [#allocation8], %s201
          %s203 = sand.u32 %s96, 1
          %s204 = smul.addr %s203, 8
          %s205 = scalar_lea.vmem [#allocation9], %s204
          %s206 = ssub.s32 %s16, 1
          %p207 = scmp.gt.s32.totalorder %s206, 0
          %s208 = scalar_select %p207, %s206, 0
          %p209 = scmp.lt.s32.totalorder %s208, 0
          %s210 = scalar_select %p209, %s208, 0
          %s212 = ssub.s32 128, 128
          %213 = vsyncadd %s202, %s212
          %s214 = smul.addr %s210, 128
          %s215 = scalar_lea.hbm %s2, %s214
          %s217 = sshll.u32 %s205, 4
          %s218 = int_to_ptr.vmem [resolvable:$true] %s217
          %220 = dma.hbm_to_vmem [thread:$0]  %s215, 128, %s218, %s202
        $region28: #{tpu_custom_call.1} parent=15 // pred_fallthru
          _
      $region16: #{tpu_custom_call.1} parent=5 // pred_fallthru
        _
      %p221 = scmp.le.s32.totalorder 1, %s16
      %p222 = scmp.lt.s32.totalorder %s16, 3
      %p223 = pnand %p221, %p222
      %p224 = pneg %p223
      // Predicated region
      $region29: #{tpu_custom_call.1} parent=5 // pred_check
        _
      $region30: #{tpu_custom_call.1} parent=5 // pred_check_branch
        %226 = sbr.rel (%p223) target = $region32
      $region31: #{tpu_custom_call.1} parent=5 // pred_region
        %s227 = ssub.s32 %s16, 1
        %s228 = sand.u32 %s33, 1
        %s229 = scalar_lea.sflag [#allocation5], %s228
        %s230 = sand.u32 %s33, 1
        %s231 = smul.addr %s230, 16
        %s232 = scalar_lea.vmem [#allocation4], %s231
        // Predicated region
        $region33: #{tpu_custom_call.1} parent=31 // pred_check
          %p233 = pneg %p46
        $region34: #{tpu_custom_call.1} parent=31 // pred_check_branch
          %235 = sbr.rel (%p233) target = $region36
        $region35: #{tpu_custom_call.1} parent=31 // pred_region
          %236 = dma.done %s229, 256
        $region36: #{tpu_custom_call.1} parent=31 // pred_fallthru
          _
        %s237 = sand.u32 %s21, 1
        %s238 = scalar_lea.sflag [#allocation8], %s237
        %s239 = sand.u32 %s63, 1
        %s240 = smul.addr %s239, 16
        %s241 = scalar_lea.vmem [#allocation7], %s240
        // Predicated region
        $region37: #{tpu_custom_call.1} parent=31 // pred_check
          %p242 = pneg %p76
        $region38: #{tpu_custom_call.1} parent=31 // pred_check_branch
          %244 = sbr.rel (%p242) target = $region40
        $region39: #{tpu_custom_call.1} parent=31 // pred_region
          %245 = dma.done %s238, 256
        $region40: #{tpu_custom_call.1} parent=31 // pred_fallthru
          _
        %s246 = sand.u32 %s21, 1
        %s247 = scalar_lea.sflag [#allocation8], %s246
        %s248 = sand.u32 %s99, 1
        %s249 = smul.addr %s248, 8
        %s250 = scalar_lea.vmem [#allocation9], %s249
        // Predicated region
        $region41: #{tpu_custom_call.1} parent=31 // pred_check
          %p251 = pneg %p112
        $region42: #{tpu_custom_call.1} parent=31 // pred_check_branch
          %253 = sbr.rel (%p251) target = $region44
        $region43: #{tpu_custom_call.1} parent=31 // pred_region
          %254 = dma.done %s247, 128
        $region44: #{tpu_custom_call.1} parent=31 // pred_fallthru
          _
        %s255 = sand.u32 %s33, 1
        %s256 = scalar_lea.sflag [#allocation5], %s255
        %s257 = sand.u32 %s33, 1
        %s258 = smul.addr %s257, 16
        %s259 = scalar_lea.vmem [#allocation4], %s258
        %p260 = pneg %p46
        %p261 = pneg %p43
        %s262 = sand.u32 %s21, 1
        %s263 = scalar_lea.sflag [#allocation8], %s262
        %s264 = sand.u32 %s63, 1
        %s265 = smul.addr %s264, 16
        %s266 = scalar_lea.vmem [#allocation7], %s265
        %p267 = pneg %p76
        %p268 = pneg %p73
        %s269 = sand.u32 %s21, 1
        %s270 = scalar_lea.sflag [#allocation8], %s269
        %s271 = sand.u32 %s99, 1
        %s272 = smul.addr %s271, 8
        %s273 = scalar_lea.vmem [#allocation9], %s272
        %p274 = pneg %p112
        %p275 = pneg %p109
        %p276 = pneg %p133
        %p277 = pneg %p130
        %p278 = scmp.lt.s32.totalorder %s21, 0
        %s279 = scalar_select %p278, %s21, 0
        %s280 = smul.u32 2, %s279
        %p281 = scmp.lt.s32.totalorder %s21, 0
        %s282 = scalar_select %p281, %s21, 0
        %s283 = smul.u32 2, %s282
        %s284 = ssub.s32 %s21, 1
        %p285 = scmp.gt.s32.totalorder %s284, 0
        %s286 = scalar_select %p285, %s284, 0
        %p287 = scmp.lt.s32.totalorder %s286, 0
        %s288 = scalar_select %p287, %s286, 0
        %p289 = scmp.eq.s32.totalorder %s21, 0
        // Predicated region
        $region45: #{tpu_custom_call.1} parent=31 // pred_check
          %p290 = pneg %p289
        $region46: #{tpu_custom_call.1} parent=31 // pred_check_branch
          %292 = sbr.rel (%p290) target = $region48
        $region47: #{tpu_custom_call.1} parent=31 // pred_region
          %293 = vst [vmem:[#allocation2] sm:$0x1] 0.0
          %294 = vst [vmem:[#allocation3] sm:$0x1] 0.0
        $region48: #{tpu_custom_call.1} parent=31 // pred_fallthru
          _
        %p295 = scmp.lt.s32.totalorder %s21, 1
        // Predicated region
        $region49: #{tpu_custom_call.1} parent=31 // pred_check
          %p296 = pneg %p295
        $region50: #{tpu_custom_call.1} parent=31 // pred_check_branch
          %298 = sbr.rel (%p296) target = $region52
        $region51: #{tpu_custom_call.1} parent=31 // pred_region
          %v299 = vld [vmem:[%s232] sm:$0xff]
          %v300 = vld [vmem:[%s232 + $0x8] sm:$0xff]
          %v301 = vld [vmem:[%s241] sm:$0xff]
          %v302 = vld [vmem:[%s241 + $0x8] sm:$0xff]
          %v303 = vmax.f32 %v299, 0.0
          %v304 = vmax.f32 %v300, 0.0
          %v305 = vmul.f32 %v299, %v301
          %v306 = vmul.f32 %v300, %v302
          %v307 = vsub.f32 %v303, %v305
          %v308 = vsub.f32 %v304, %v306
          %v309 = vand.u32 2147483647, %v299
          %v310 = vand.u32 2147483647, %v300
          %v311 = vsub.f32 0.0, %v309
          %v312 = vsub.f32 0.0, %v310
          %v313 = vmul.f32 %v311, 1.442695
          %v314 = vpow.pop %v313
          %v315 = vmul.f32 %v312, 1.442695
          %v316 = vpow.pop %v315
          %v317 = vadd.f32 %v314, 1.0
          %v318 = vlog2.pop %v317
          %v319 = vmul.f32 %v318, 0.6931472
          %v320 = vmul.f32 -0.5, %v314
          %v321 = vadd.f32 %v320, 1.0
          %v322 = vmul.f32 %v321, %v314
          %v323 = vand.u32 2147483647, %v314
          %vm324 = vcmp.lt.f32.partialorder %v323, 0.0004427343
          %v325 = vsel %vm324, %v322, %v319
          %v326 = vadd.f32 %v316, 1.0
          %v327 = vlog2.pop %v326
          %v328 = vmul.f32 %v327, 0.6931472
          %v329 = vmul.f32 -0.5, %v316
          %v330 = vadd.f32 %v329, 1.0
          %v331 = vmul.f32 %v330, %v316
          %v332 = vand.u32 2147483647, %v316
          %vm333 = vcmp.lt.f32.partialorder %v332, 0.0004427343
          %v334 = vsel %vm333, %v331, %v328
          %v335 = vadd.f32 %v307, %v325
          %v336 = vadd.f32 %v308, %v334
          %v337 = vld [vmem:[#allocation2] sm:$0x1]
          %v338 = vadd.f32 %v335, %v336
          %v339 = vrot.slane %v338, 4
          %v340 = vadd.f32 %v338, %v339
          %v341 = vrot.slane %v340, 2
          %v342 = vadd.f32 %v340, %v341
          %v343 = vrot.slane %v342, 1
          %v344 = vadd.f32 %v342, %v343
          %v345 = vadd.f32 %v337, %v344
          %346 = vst [vmem:[#allocation2] sm:$0x1] %v345
        $region52: #{tpu_custom_call.1} parent=31 // pred_fallthru
          _
        %p347 = scmp.ge.s32.totalorder %s21, 1
        // Predicated region
        $region53: #{tpu_custom_call.1} parent=31 // pred_check
          %p348 = pneg %p347
        $region54: #{tpu_custom_call.1} parent=31 // pred_check_branch
          %350 = sbr.rel (%p348) target = $region56
        $region55: #{tpu_custom_call.1} parent=31 // pred_region
          %v351 = vld [vmem:[%s250] sm:$0xff]
          %v352 = vld [vmem:[#allocation3] sm:$0x1]
          %v353 = vmul.f32 %v351, %v351
          %v354 = vrot.slane %v353, 4
          %v355 = vadd.f32 %v353, %v354
          %v356 = vrot.slane %v355, 2
          %v357 = vadd.f32 %v355, %v356
          %v358 = vrot.slane %v357, 1
          %v359 = vadd.f32 %v357, %v358
          %v360 = vadd.f32 %v352, %v359
          %361 = vst [vmem:[#allocation3] sm:$0x1] %v360
        $region56: #{tpu_custom_call.1} parent=31 // pred_fallthru
          _
        %p362 = scmp.eq.s32.totalorder %s21, 1
        // Predicated region
        $region57: #{tpu_custom_call.1} parent=31 // pred_check
          %p363 = pneg %p362
        $region58: #{tpu_custom_call.1} parent=31 // pred_check_branch
          %365 = sbr.rel (%p363) target = $region60
        $region59: #{tpu_custom_call.1} parent=31 // pred_region
          %v366 = vld [vmem:[#allocation2] sm:$0x1]
          %vm367 = vcmask 1040384
          %v368 = vsel %vm367, %v366, 0.0
          %369 = vadd.xlane.f32.xlu0 %v368
          %v370 = vpop.xlane.xlu0 %369
          %v371 = vrot.slane %v370, 4
          %v372 = vadd.f32 %v370, %v371
          %v373 = vrot.slane %v372, 2
          %v374 = vadd.f32 %v372, %v373
          %v375 = vrot.slane %v374, 1
          %v376 = vadd.f32 %v374, %v375
          %s377 = vtos %v376
          %s378 = smul.f32 %s377, 0.00048828125
          %v379 = vld [vmem:[#allocation3] sm:$0x1]
          %v380 = vsel %vm367, %v379, 0.0
          %381 = vadd.xlane.f32.xlu0 %v380
          %v382 = vpop.xlane.xlu0 %381
          %v383 = vrot.slane %v382, 4
          %v384 = vadd.f32 %v382, %v383
          %v385 = vrot.slane %v384, 2
          %v386 = vadd.f32 %v384, %v385
          %v387 = vrot.slane %v386, 1
          %v388 = vadd.f32 %v386, %v387
          %s389 = vtos %v388
          %s390 = smul.f32 %s389, 0.001
          %s391 = sadd.f32 %s378, %s390
          %s392 = scalar_lea.smem [#allocation10], 0
          %393 = sst [smem:[%s392]] %s391
        $region60: #{tpu_custom_call.1} parent=31 // pred_fallthru
          _
        // Predicated region
        $region61: #{tpu_custom_call.1} parent=31 // pred_check
          %p394 = pneg %p130
        $region62: #{tpu_custom_call.1} parent=31 // pred_check_branch
          %396 = sbr.rel (%p394) target = $region64
        $region63: #{tpu_custom_call.1} parent=31 // pred_region
          %s398 = ssub.s32 16, 16
          %399 = vsyncadd [#allocation6], %s398
          %402 = dma.smem_to_hbm [#allocation10], 16, %s3, [#allocation6]
        $region64: #{tpu_custom_call.1} parent=31 // pred_fallthru
          _
        // Predicated region
        $region65: #{tpu_custom_call.1} parent=31 // pred_check
          %p403 = pneg %p130
        $region66: #{tpu_custom_call.1} parent=31 // pred_check_branch
          %405 = sbr.rel (%p403) target = $region68
        $region67: #{tpu_custom_call.1} parent=31 // pred_region
          %406 = dma.done [#allocation6], 16
        $region68: #{tpu_custom_call.1} parent=31 // pred_fallthru
          _
        %407 = sfence
      $region32: #{tpu_custom_call.1} parent=5 // pred_fallthru
        _
      %p408 = scmp.le.s32.totalorder 2, %s16
      // Predicated region
      $region69: #{tpu_custom_call.1} parent=5 // pred_check
        %p409 = pneg %p408
      $region70: #{tpu_custom_call.1} parent=5 // pred_check_branch
        %411 = sbr.rel (%p409) target = $region72
      $region71: #{tpu_custom_call.1} parent=5 // pred_region
        %s412 = ssub.s32 %s16, 2
      $region72: #{tpu_custom_call.1} parent=5 // pred_fallthru
        _
    $region6: #{tpu_custom_call.1} parent=1 // loop_footer
      %s20 = sadd.s32 1, %s16
    $region7: #{tpu_custom_call.1} parent=1 // loop_footer_branch
      %15 = sbr.rel target = $region3
    $region8: #{tpu_custom_call.1} parent=1 // loop_exit
      _
    %413 = vsyncpa [#allocation5], 1
    %s414 = scalar_lea.sflag [#allocation5], 1
    %415 = vsyncpa %s414, 1
    %416 = vsyncpa [#allocation8], 1
    %s417 = scalar_lea.sflag [#allocation8], 1
    %418 = vsyncpa %s417, 1
    %419 = vsyncpa [#allocation6], 1
    %s420 = scalar_lea.sflag [#allocation6], 1
    %421 = vsyncpa %s420, 1

</llo_original>
